<compile_context>
chip_gen: v7x
topology: tpu7x:2x2x1
jax: 0.10.0
libtpu: 0.0.40
codegen_flags: <defaults>
</compile_context>

<pallas_src>
import jax
import jax.numpy as jnp
from jax.experimental import pallas as pl
from jax.experimental.pallas import tpu as pltpu


# ---------------------------------------------------------------------------
# Kernel: one (tm, tn) tile of  adj = z @ z.T
# ---------------------------------------------------------------------------
def inner_product_decoder_kernel(z_row_ref, zt_col_ref, adj_ref):
    # (tm, d) @ (d, tn) -> (tm, tn); z.T was materialized once in the wrapper
    # (tiny d x N array) so the MXU RHS feed is lane-dense and no per-tile
    # transpose is emitted.
    adj_ref[...] = jnp.dot(
        z_row_ref[...],
        zt_col_ref[...],
        preferred_element_type=jnp.float32,
    ).astype(adj_ref.dtype)


# ---------------------------------------------------------------------------
# Wrapper
# ---------------------------------------------------------------------------
def _round_up(x, m):
    return ((x + m - 1) // m) * m


def _pick_tile(n_pad, preferred, unit):
    """Largest multiple of `unit` that is <= preferred and divides n_pad."""
    best = unit
    t = unit
    cap = min(preferred, n_pad)
    while t <= cap:
        if n_pad % t == 0:
            best = t
        t += unit
    return best


def inner_product_decode(z, *, tile_m=512, tile_n=512, out_dtype=None):
    """adj = dropout(z) @ dropout(z).T  (eval-mode dropout == identity)."""
    # TODO(synk): training-mode dropout (Bernoulli mask + 1/(1-p) rescale on z)
    # is not implemented; inference semantics (identity) are used.
    n, d = z.shape
    out_dtype = z.dtype if out_dtype is None else out_dtype

    # Pad N up to a multiple of 128 so every tile is lane-dense; tiles are
    # multiples of 128 on both output dims (128 also satisfies the sublane
    # multiple-of-8 rule).
    n_pad = _round_up(n, 128)
    tn = _pick_tile(n_pad, tile_n, 128)   # lane dim: multiples of 128 only
    tm = _pick_tile(n_pad, tile_m, 128)   # sublane dim

    # Ensure at least one "parallel" axis has >= 2 blocks so both v7x
    # TensorCores get work (no-op when the grid is already bigger than 1x1).
    if n_pad // tm == 1 and n_pad // tn == 1 and n_pad > 128:
        tm = n_pad // 2  # n_pad is a multiple of 128 -> tm is a multiple of 64

    grid = (n_pad // tm, n_pad // tn)

    z_pad = z if n_pad == n else jnp.pad(z, ((0, n_pad - n), (0, 0)))
    zt = z_pad.T  # (d, n_pad) — tiny, done once outside the kernel

    out_itemsize = jnp.dtype(out_dtype).itemsize
    in_itemsize = jnp.dtype(z.dtype).itemsize

    # Double-buffered footprint: output tile + row tile + column tile.
    vmem_limit = 2 * (tm * tn * out_itemsize + (tm + tn) * d * in_itemsize)
    vmem_limit = int(vmem_limit * 1.5) + (2 << 20)
    vmem_limit = min(max(vmem_limit, 16 << 20), 48 << 20)

    cost = pl.CostEstimate(
        flops=2 * n_pad * n_pad * d,
        transcendentals=0,
        bytes_accessed=n_pad * n_pad * out_itemsize + 2 * n_pad * d * in_itemsize,
    )

    adj = pl.pallas_call(
        inner_product_decoder_kernel,
        out_shape=jax.ShapeDtypeStruct((n_pad, n_pad), out_dtype),
        grid_spec=pltpu.PrefetchScalarGridSpec(
            num_scalar_prefetch=0,
            grid=grid,
            in_specs=[
                # row block of z for output-tile row i (revisited while j sweeps)
                pl.BlockSpec((tm, d), lambda i, j: (i, 0)),
                # column block of z.T for output-tile column j (lane-dense RHS)
                pl.BlockSpec((d, tn), lambda i, j: (0, j)),
            ],
            out_specs=pl.BlockSpec((tm, tn), lambda i, j: (i, j)),
        ),
        compiler_params=pltpu.CompilerParams(
            # independent output tiles -> shard across TensorCores on v7x;
            # harmless on v5e/v6e.
            dimension_semantics=("parallel", "parallel"),
            vmem_limit_bytes=vmem_limit,
        ),
        cost_estimate=cost,
    )(z_pad, zt)

    if n_pad != n:
        adj = adj[:n, :n]
    return adj


# ---------------------------------------------------------------------------
if __name__ == "__main__":
    key = jax.random.PRNGKey(0)
    D = 16  # latent embedding dim (hidden_dim2 in ARGA)

    # Case 1: N a multiple of 128 (no padding path; grid split for megacore).
    N1 = 256
    z1 = jax.random.normal(key, (N1, D), dtype=jnp.float32)
    adj1 = inner_product_decode(z1)
    jax.block_until_ready(adj1)
    assert adj1.shape == (N1, N1)
    assert jnp.allclose(adj1, z1 @ z1.T, atol=1e-4, rtol=1e-4)

    # Case 2: N not a multiple of 128 (zero-pad + slice path).
    N2 = 200
    z2 = jax.random.normal(jax.random.PRNGKey(0), (N2, D), dtype=jnp.float32)
    adj2 = inner_product_decode(z2)
    jax.block_until_ready(adj2)
    assert adj2.shape == (N2, N2)
    assert jnp.allclose(adj2, z2 @ z2.T, atol=1e-4, rtol=1e-4)

    print("KERNEL_OK")
</pallas_src>

<mosaic_0001>
module attributes {stable_mosaic.version = 11 : i64} {
  func.func @inner_product_decoder_kernel(%arg0: i32, %arg1: i32, %arg2: memref<128x16xf32, #tpu.memory_space<vmem>>, %arg3: memref<16x256xf32, #tpu.memory_space<vmem>>, %arg4: memref<128x256xf32, #tpu.memory_space<vmem>>) attributes {dimension_semantics = [#tpu.dimension_semantics<parallel>, #tpu.dimension_semantics<parallel>], iteration_bounds = array<i64: 2, 1>, scalar_prefetch = 0 : i64, scratch_operands = 0 : i64, tpu.core_type = #tpu.core_type<tc>, window_params = [{transform_indices = @transform_0, window_bounds = array<i64: 128, 16>}, {transform_indices = @transform_1, window_bounds = array<i64: 16, 256>}, {transform_indices = @transform_2, window_bounds = array<i64: 128, 256>}]} {
    %c0 = arith.constant 0 : index
    %c0_0 = arith.constant 0 : index
    %0 = vector.load %arg2[%c0, %c0_0] : memref<128x16xf32, #tpu.memory_space<vmem>>, vector<128x16xf32>
    %c0_1 = arith.constant 0 : index
    %c0_2 = arith.constant 0 : index
    %1 = vector.load %arg3[%c0_1, %c0_2] : memref<16x256xf32, #tpu.memory_space<vmem>>, vector<16x256xf32>
    %cst = arith.constant dense<0.000000e+00> : vector<128x256xf32>
    %2 = tpu.matmul %0, %1, %cst {dimension_numbers = #tpu.dot_dimension_numbers<[1], [0], [0], [1], [0, 0, 1, 1], [], []>} : vector<128x16xf32>, vector<16x256xf32>, vector<128x256xf32> -> vector<128x256xf32>
    %c0_3 = arith.constant 0 : index
    %c0_4 = arith.constant 0 : index
    %3 = vector.load %arg4[%c0_3, %c0_4] : memref<128x256xf32, #tpu.memory_space<vmem>>, vector<128x256xf32>
    tpu.vector_store %arg4[%c0_3, %c0_4], %2 {strides = array<i32>} : memref<128x256xf32, #tpu.memory_space<vmem>>, vector<128x256xf32>,
    return
  }
  func.func @transform_0(%arg0: i32, %arg1: i32) -> (i32, i32) {
    %c0_i32 = arith.constant 0 : i32
    %c0_i32_0 = arith.constant 0 : i32
    return %arg0, %c0_i32 : i32, i32
  }
  func.func @transform_1(%arg0: i32, %arg1: i32) -> (i32, i32) {
    %c0_i32 = arith.constant 0 : i32
    %c0_i32_0 = arith.constant 0 : i32
    return %c0_i32, %arg1 : i32, i32
  }
  func.func @transform_2(%arg0: i32, %arg1: i32) -> (i32, i32) {
    %c0_i32 = arith.constant 0 : i32
    return %arg0, %arg1 : i32, i32
  }
}

</mosaic_0001>

<llo_original>
// kernel: tpu_custom_call.1
$region0: #{tpu_custom_call.1}
  #allocation0 [shape = 'u32[]', space=smem, size = 0x4, offset = 0x4, fixed_abs, tag = 'smem constant byte address 0x4 - core index']
  #allocation1 [shape = 'u32[144,128]{1,0:T(1,128)}', space=vmem, size = 0x12000, scoped, tag = 'internal scratch']
  %s0 = inlined_call_operand.vmem [shape: f32[256,16], index: 0, kind: input, shape index: {}]
  %s1 = inlined_call_operand.vmem [shape: f32[16,256], index: 1, kind: input, shape index: {}]
  %s2 = inlined_call_operand.hbm [shape: f32[256,256], index: 2, kind: output, shape index: {}]
  %s3 = sld [smem:[#allocation0]]
  $region41: #{tpu_custom_call.1} parent=0
    _
  %s5 = ssub.s32 1, %s3
  %s6 = scalar_select 0, %s5, %s3
  $region1: #{tpu_custom_call.1} parent=0
    #allocation2 [shape = 'u8[262144]{0}', space=vmem, size = 0x40000, scoped, tag = 'output window, operand 0']
    #allocation3 [shape = 's32[2]{0}', space=sflag, size = 0x8, scoped, tag = 'scoped memory for tpu_custom_call.1']
    %7 = vsyncpa [#allocation3], 0
    %s8 = scalar_lea.sflag [#allocation3], 1
    %9 = vsyncpa %s8, 0
    loop: start=0, step=1, limit=4
    $region2: #{tpu_custom_call.1} parent=1 // loop_pre_header
      _
    $region3: #{tpu_custom_call.1} parent=1 // loop_header
      %s11 = sphi 0, %s15
      %p12 = scmp.ge.s32.totalorder %s11, 4
      %s18 = sphi 0, %s30
      %s19 = sphi 0, %s26
      %s20 = sphi 0, %s18
      %s21 = sphi 0, %s19
      %s22 = sphi 0, %s20
      %s23 = sphi 0, %s21
      %s33 = sphi 0, %s35
      %s36 = sphi 0, %s33
      %s37 = sphi 0, %s36
      %s53 = sphi 0, %s37
      %s59 = sphi 0, %s61
      %s62 = sphi 0, %s59
      %s63 = sphi 0, %s62
      %s79 = sphi 0, %s63
      %s87 = sphi 0, %s89
      %s90 = sphi 0, %s87
      %s91 = sphi 0, %s90
      %s107 = sphi 0, %s91
    $region4: #{tpu_custom_call.1} parent=1 // loop_header_branch
      %14 = sbr.rel (%p12) target = $region8
    $region5: #{tpu_custom_call.1} parent=1 // loop_body
      %s16 = ssub.s32 %s11, 1
      %s17 = ssub.s32 %s11, 2
      %s24 = sadd.s32 1, %s19
      %p25 = scmp.ge.s32.totalorder %s24, 1
      %s26 = scalar_select %p25, 0, %s24
      %s27 = sadd.s32 1, %s18
      %s28 = scalar_select %p25, %s27, %s18
      %p29 = scmp.ge.s32.totalorder %s28, 2
      %s30 = scalar_select %p29, 0, %s28
      %s31 = ssub.s32 %s18, %s30
      %p32 = scmp.eq.s32.totalorder %s31, 0
      %s34 = sadd.s32 %s33, 1
      %s35 = scalar_select %p32, %s33, %s34
      %p38 = pneg %p32
      %p39 = scmp.eq.s32.totalorder %s11, 1
      %p40 = por %p38, %p39
      %p41 = scmp.ne.s32.totalorder %s33, %s36
      %p42 = scmp.eq.s32.totalorder %s11, 0
      %p43 = por %p41, %p42
      %p44 = scmp.ne.s32.totalorder %s33, %s36
      %p45 = scmp.eq.s32.totalorder %s16, 1
      %p46 = por %p44, %p45
      %p47 = scmp.ne.s32.totalorder %s36, %s37
      %p48 = scmp.eq.s32.totalorder %s16, 0
      %p49 = por %p47, %p48
      %p50 = scmp.ne.s32.totalorder %s36, %s37
      %p51 = scmp.eq.s32.totalorder %s17, 1
      %p52 = por %p50, %p51
      %p54 = scmp.ne.s32.totalorder %s37, %s53
      %p55 = scmp.eq.s32.totalorder %s17, 0
      %p56 = por %p54, %p55
      %s57 = ssub.s32 %s19, %s26
      %p58 = scmp.eq.s32.totalorder %s57, 0
      %s60 = sadd.s32 %s59, 1
      %s61 = scalar_select %p58, %s59, %s60
      %p64 = pneg %p58
      %p65 = scmp.eq.s32.totalorder %s11, 1
      %p66 = por %p64, %p65
      %p67 = scmp.ne.s32.totalorder %s59, %s62
      %p68 = scmp.eq.s32.totalorder %s11, 0
      %p69 = por %p67, %p68
      %p70 = scmp.ne.s32.totalorder %s59, %s62
      %p71 = scmp.eq.s32.totalorder %s16, 1
      %p72 = por %p70, %p71
      %p73 = scmp.ne.s32.totalorder %s62, %s63
      %p74 = scmp.eq.s32.totalorder %s16, 0
      %p75 = por %p73, %p74
      %p76 = scmp.ne.s32.totalorder %s62, %s63
      %p77 = scmp.eq.s32.totalorder %s17, 1
      %p78 = por %p76, %p77
      %p80 = scmp.ne.s32.totalorder %s63, %s79
      %p81 = scmp.eq.s32.totalorder %s17, 0
      %p82 = por %p80, %p81
      %s83 = ssub.s32 %s18, %s30
      %s84 = ssub.s32 %s19, %s26
      %s85 = sor.u32 %s83, %s84
      %p86 = scmp.eq.s32.totalorder %s85, 0
      %s88 = sadd.s32 %s87, 1
      %s89 = scalar_select %p86, %s87, %s88
      %p92 = pneg %p86
      %p93 = scmp.eq.s32.totalorder %s11, 1
      %p94 = por %p92, %p93
      %p95 = scmp.ne.s32.totalorder %s87, %s90
      %p96 = scmp.eq.s32.totalorder %s11, 0
      %p97 = por %p95, %p96
      %p98 = scmp.ne.s32.totalorder %s87, %s90
      %p99 = scmp.eq.s32.totalorder %s16, 1
      %p100 = por %p98, %p99
      %p101 = scmp.ne.s32.totalorder %s90, %s91
      %p102 = scmp.eq.s32.totalorder %s16, 0
      %p103 = por %p101, %p102
      %p104 = scmp.ne.s32.totalorder %s90, %s91
      %p105 = scmp.eq.s32.totalorder %s17, 1
      %p106 = por %p104, %p105
      %p108 = scmp.ne.s32.totalorder %s91, %s107
      %p109 = scmp.eq.s32.totalorder %s17, 0
      %p110 = por %p108, %p109
      %p111 = scmp.le.s32.totalorder 1, %s11
      %p112 = scmp.lt.s32.totalorder %s11, 3
      %p113 = pnand %p111, %p112
      %p114 = pneg %p113
      // Predicated region
      $region9: #{tpu_custom_call.1} parent=5 // pred_check
        _
      $region10: #{tpu_custom_call.1} parent=5 // pred_check_branch
        %116 = sbr.rel (%p113) target = $region12
      $region11: #{tpu_custom_call.1} parent=5 // pred_region
        %s117 = ssub.s32 %s11, 1
        // Predicated region
        $region13: #{tpu_custom_call.1} parent=11 // pred_check
          %p118 = pneg %p75
        $region14: #{tpu_custom_call.1} parent=11 // pred_check_branch
          %120 = sbr.rel (%p118) target = $region16
        $region15: #{tpu_custom_call.1} parent=11 // pred_region
          %s121 = smul.u32 2, %s21
          %p122 = scmp.lt.s32.totalorder %s121, 1
          %s123 = scalar_select %p122, %s121, 1
          %s124 = smul.addr %s123, 8
          %s125 = scalar_lea.vmem %s1, %s124
          %s126 = smul.u32 2, %s21
        $region16: #{tpu_custom_call.1} parent=11 // pred_fallthru
          _
      $region12: #{tpu_custom_call.1} parent=5 // pred_fallthru
        _
      %p127 = scmp.lt.s32.totalorder %s11, 2
      // Predicated region
      $region17: #{tpu_custom_call.1} parent=5 // pred_check
        %p128 = pneg %p127
      $region18: #{tpu_custom_call.1} parent=5 // pred_check_branch
        %130 = sbr.rel (%p128) target = $region20
      $region19: #{tpu_custom_call.1} parent=5 // pred_region
        // Predicated region
        $region21: #{tpu_custom_call.1} parent=19 // pred_check
          %p131 = pneg %p43
        $region22: #{tpu_custom_call.1} parent=19 // pred_check_branch
          %133 = sbr.rel (%p131) target = $region24
        $region23: #{tpu_custom_call.1} parent=19 // pred_region
          %s134 = smul.u32 16, %s18
          %p135 = scmp.lt.s32.totalorder %s134, 31
          %s136 = scalar_select %p135, %s134, 31
          %s137 = smul.addr %s136, 8
          %s138 = scalar_lea.vmem %s0, %s137
          %s139 = smul.u32 16, %s18
        $region24: #{tpu_custom_call.1} parent=19 // pred_fallthru
          _
      $region20: #{tpu_custom_call.1} parent=5 // pred_fallthru
        _
      %p140 = scmp.le.s32.totalorder 1, %s11
      %p141 = scmp.lt.s32.totalorder %s11, 3
      %p142 = pnand %p140, %p141
      %p143 = pneg %p142
      // Predicated region
      $region25: #{tpu_custom_call.1} parent=5 // pred_check
        _
      $region26: #{tpu_custom_call.1} parent=5 // pred_check_branch
        %145 = sbr.rel (%p142) target = $region28
      $region27: #{tpu_custom_call.1} parent=5 // pred_region
        %s146 = ssub.s32 %s11, 1
        %s147 = smul.u32 16, %s20
        %p148 = scmp.lt.s32.totalorder %s147, 31
        %s149 = scalar_select %p148, %s147, 31
        %s150 = smul.addr %s149, 8
        %s151 = scalar_lea.vmem %s0, %s150
        %p152 = pneg %p49
        %p153 = pneg %p46
        %s154 = smul.u32 2, %s21
        %p155 = scmp.lt.s32.totalorder %s154, 1
        %s156 = scalar_select %p155, %s154, 1
        %s157 = smul.addr %s156, 8
        %s158 = scalar_lea.vmem %s1, %s157
        %p159 = pneg %p75
        %p160 = pneg %p72
        %p161 = pneg %p103
        %p162 = pneg %p100
        %s163 = sand.u32 %s90, 1
        %s164 = scalar_lea.sflag [#allocation3], %s163
        %s165 = sand.u32 %s90, 1
        %s166 = smul.addr %s165, 256
        %s167 = scalar_lea.vmem [#allocation2], %s166
        %s168 = smul.u32 16, %s20
        %p169 = scmp.lt.s32.totalorder %s168, 31
        %s170 = scalar_select %p169, %s168, 31
        %s171 = smul.addr %s170, 8
        %s172 = scalar_lea.vmem %s0, %s171
        %s173 = smul.u32 16, %s20
        %s174 = smul.u32 2, %s21
        %p175 = scmp.lt.s32.totalorder %s174, 1
        %s176 = scalar_select %p175, %s174, 1
        %s177 = smul.addr %s176, 8
        %s178 = scalar_lea.vmem %s1, %s177
        %s179 = smul.u32 2, %s21
        %s180 = smul.u32 16, %s20
        %s181 = smul.u32 2, %s21
        %v182 = vld [vmem:[%s172] sm:$0xff]
        %v183 = vld [vmem:[%s172 + $0x8] sm:$0xff]
        %v184 = vld [vmem:[%s172 + $0x10] sm:$0xff]
        %v185 = vld [vmem:[%s172 + $0x18] sm:$0xff]
        %v186 = vld [vmem:[%s172 + $0x20] sm:$0xff]
        %v187 = vld [vmem:[%s172 + $0x28] sm:$0xff]
        %v188 = vld [vmem:[%s172 + $0x30] sm:$0xff]
        %v189 = vld [vmem:[%s172 + $0x38] sm:$0xff]
        %v190 = vld [vmem:[%s172 + $0x40] sm:$0xff]
        %v191 = vld [vmem:[%s172 + $0x48] sm:$0xff]
        %v192 = vld [vmem:[%s172 + $0x50] sm:$0xff]
        %v193 = vld [vmem:[%s172 + $0x58] sm:$0xff]
        %v194 = vld [vmem:[%s172 + $0x60] sm:$0xff]
        %v195 = vld [vmem:[%s172 + $0x68] sm:$0xff]
        %v196 = vld [vmem:[%s172 + $0x70] sm:$0xff]
        %v197 = vld [vmem:[%s172 + $0x78] sm:$0xff]
        %v198 = vld [vmem:[%s178] sm:$0xff]
        %v199 = vld [vmem:[%s178 + $0x8] sm:$0xff]
        %v200 = vld [vmem:[%s178 + $0x10] sm:$0xff]
        %v201 = vld [vmem:[%s178 + $0x18] sm:$0xff]
        %vm202 = vcmask 130048
        %v204 = vsel %vm202, %v182, 0
        %v207 = vsel %vm202, %v183, 0
        %v210 = vsel %vm202, %v184, 0
        %v213 = vsel %vm202, %v185, 0
        %v216 = vsel %vm202, %v186, 0
        %v219 = vsel %vm202, %v187, 0
        %v222 = vsel %vm202, %v188, 0
        %v225 = vsel %vm202, %v189, 0
        %v228 = vsel %vm202, %v190, 0
        %v231 = vsel %vm202, %v191, 0
        %v234 = vsel %vm202, %v192, 0
        %v237 = vsel %vm202, %v193, 0
        %v240 = vsel %vm202, %v194, 0
        %v243 = vsel %vm202, %v195, 0
        %v246 = vsel %vm202, %v196, 0
        %v249 = vsel %vm202, %v197, 0
        %251 = vmatprep.subr.mxu0 %v199
        %252 = vmatpush1.msra.mxu0 %v198
        %253 = vmatprep.subr.mxu0 %v201
        %254 = vmatpush1.msra.mxu0 %v200
        %255 = vmatprep.subr.mxu0 0.0
        %256 = vmatpush1.msra.mxu0 0.0
        %257 = vmatprep.subr.mxu0 0.0
        %258 = vmatpush1.msra.mxu0 0.0
        %259 = vmatprep.subr.mxu0 0.0
        %260 = vmatpush1.msra.mxu0 0.0
        %261 = vmatprep.subr.mxu0 0.0
        %262 = vmatpush1.msra.mxu0 0.0
        %263 = vmatprep.subr.mxu0 0.0
        %264 = vmatpush1.msra.mxu0 0.0
        %265 = vmatprep.subr.mxu0 0.0
        %266 = vmatpush1.msra.mxu0 0.0
        %267 = vmatprep.subr.mxu0 0.0
        %268 = vmatpush1.msra.mxu0 0.0
        %269 = vmatprep.subr.mxu0 0.0
        %270 = vmatpush1.msra.mxu0 0.0
        %271 = vmatprep.subr.mxu0 0.0
        %272 = vmatpush1.msra.mxu0 0.0
        %273 = vmatprep.subr.mxu0 0.0
        %274 = vmatpush1.msra.mxu0 0.0
        %275 = vmatprep.subr.mxu0 0.0
        %276 = vmatpush1.msra.mxu0 0.0
        %277 = vmatprep.subr.mxu0 0.0
        %278 = vmatpush1.msra.mxu0 0.0
        %279 = vmatprep.subr.mxu0 0.0
        %280 = vmatpush1.msra.mxu0 0.0
        %281 = vmatprep.subr.mxu0 0.0
        %282 = vmatpush1.msra.mxu0 0.0
        %283 = vmatprep.subr.mxu0 0.0
        %284 = vmatpush1.msra.mxu0 0.0
        %285 = vmatprep.subr.mxu0 0.0
        %286 = vmatpush1.msra.mxu0 0.0
        %287 = vmatprep.subr.mxu0 0.0
        %288 = vmatpush1.msra.mxu0 0.0
        %289 = vmatprep.subr.mxu0 0.0
        %290 = vmatpush1.msra.mxu0 0.0
        %291 = vmatprep.subr.mxu0 0.0
        %292 = vmatpush1.msra.mxu0 0.0
        %293 = vmatprep.subr.mxu0 0.0
        %294 = vmatpush1.msra.mxu0 0.0
        %295 = vmatprep.subr.mxu0 0.0
        %296 = vmatpush1.msra.mxu0 0.0
        %297 = vmatprep.subr.mxu0 0.0
        %298 = vmatpush1.msra.mxu0 0.0
        %299 = vmatprep.subr.mxu0 0.0
        %300 = vmatpush1.msra.mxu0 0.0
        %301 = vmatprep.subr.mxu0 0.0
        %302 = vmatpush1.msra.mxu0 0.0
        %303 = vmatprep.subr.mxu0 0.0
        %304 = vmatpush1.msra.mxu0 0.0
        %305 = vmatprep.subr.mxu0 0.0
        %306 = vmatpush1.msra.mxu0 0.0
        %307 = vmatprep.subr.mxu0 0.0
        %308 = vmatpush1.msra.mxu0 0.0
        %309 = vmatprep.subr.mxu0 0.0
        %310 = vmatpush1.msra.mxu0 0.0
        %311 = vmatprep.subr.mxu0 0.0
        %312 = vmatpush1.msra.mxu0 0.0
        %313 = vmatprep.subr.mxu0 0.0
        %314 = vmatpush1.msra.mxu0 0.0
        %315 = vmatprep.mubr.f32.mxu0 0.0
        %316 = vmatmul.mubr.f32.gmra.mrb[0].mxu0 %v204
        %v317 = vpop.f32.mrb[0].mxu0
        %v318 = vadd.f32 0.0, %v317
        %v319 = vpop.f32.mrb[0].mxu0
        %v320 = vadd.f32 0.0, %v319
        %321 = vmatprep.mubr.f32.mxu0 0.0
        %322 = vmatmul.mubr.f32.gmra.mrb[0].mxu0 %v207
        %v323 = vpop.f32.mrb[0].mxu0
        %v324 = vadd.f32 0.0, %v323
        %v325 = vpop.f32.mrb[0].mxu0
        %v326 = vadd.f32 0.0, %v325
        %327 = vmatprep.mubr.f32.mxu0 0.0
        %328 = vmatmul.mubr.f32.gmra.mrb[0].mxu0 %v210
        %v329 = vpop.f32.mrb[0].mxu0
        %v330 = vadd.f32 0.0, %v329
        %v331 = vpop.f32.mrb[0].mxu0
        %v332 = vadd.f32 0.0, %v331
        %333 = vmatprep.mubr.f32.mxu0 0.0
        %334 = vmatmul.mubr.f32.gmra.mrb[0].mxu0 %v213
        %v335 = vpop.f32.mrb[0].mxu0
        %v336 = vadd.f32 0.0, %v335
        %v337 = vpop.f32.mrb[0].mxu0
        %v338 = vadd.f32 0.0, %v337
        %339 = vmatprep.mubr.f32.mxu0 0.0
        %340 = vmatmul.mubr.f32.gmra.mrb[0].mxu0 %v216
        %v341 = vpop.f32.mrb[0].mxu0
        %v342 = vadd.f32 0.0, %v341
        %v343 = vpop.f32.mrb[0].mxu0
        %v344 = vadd.f32 0.0, %v343
        %345 = vmatprep.mubr.f32.mxu0 0.0
        %346 = vmatmul.mubr.f32.gmra.mrb[0].mxu0 %v219
        %v347 = vpop.f32.mrb[0].mxu0
        %v348 = vadd.f32 0.0, %v347
        %v349 = vpop.f32.mrb[0].mxu0
        %v350 = vadd.f32 0.0, %v349
        %351 = vmatprep.mubr.f32.mxu0 0.0
        %352 = vmatmul.mubr.f32.gmra.mrb[0].mxu0 %v222
        %v353 = vpop.f32.mrb[0].mxu0
        %v354 = vadd.f32 0.0, %v353
        %v355 = vpop.f32.mrb[0].mxu0
        %v356 = vadd.f32 0.0, %v355
        %357 = vmatprep.mubr.f32.mxu0 0.0
        %358 = vmatmul.mubr.f32.gmra.mrb[0].mxu0 %v225
        %v359 = vpop.f32.mrb[0].mxu0
        %v360 = vadd.f32 0.0, %v359
        %v361 = vpop.f32.mrb[0].mxu0
        %v362 = vadd.f32 0.0, %v361
        %363 = vmatprep.mubr.f32.mxu0 0.0
        %364 = vmatmul.mubr.f32.gmra.mrb[0].mxu0 %v228
        %v365 = vpop.f32.mrb[0].mxu0
        %v366 = vadd.f32 0.0, %v365
        %v367 = vpop.f32.mrb[0].mxu0
        %v368 = vadd.f32 0.0, %v367
        %369 = vmatprep.mubr.f32.mxu0 0.0
        %370 = vmatmul.mubr.f32.gmra.mrb[0].mxu0 %v231
        %v371 = vpop.f32.mrb[0].mxu0
        %v372 = vadd.f32 0.0, %v371
        %v373 = vpop.f32.mrb[0].mxu0
        %v374 = vadd.f32 0.0, %v373
        %375 = vmatprep.mubr.f32.mxu0 0.0
        %376 = vmatmul.mubr.f32.gmra.mrb[0].mxu0 %v234
        %v377 = vpop.f32.mrb[0].mxu0
        %v378 = vadd.f32 0.0, %v377
        %v379 = vpop.f32.mrb[0].mxu0
        %v380 = vadd.f32 0.0, %v379
        %381 = vmatprep.mubr.f32.mxu0 0.0
        %382 = vmatmul.mubr.f32.gmra.mrb[0].mxu0 %v237
        %v383 = vpop.f32.mrb[0].mxu0
        %v384 = vadd.f32 0.0, %v383
        %v385 = vpop.f32.mrb[0].mxu0
        %v386 = vadd.f32 0.0, %v385
        %387 = vmatprep.mubr.f32.mxu0 0.0
        %388 = vmatmul.mubr.f32.gmra.mrb[0].mxu0 %v240
        %v389 = vpop.f32.mrb[0].mxu0
        %v390 = vadd.f32 0.0, %v389
        %v391 = vpop.f32.mrb[0].mxu0
        %v392 = vadd.f32 0.0, %v391
        %393 = vmatprep.mubr.f32.mxu0 0.0
        %394 = vmatmul.mubr.f32.gmra.mrb[0].mxu0 %v243
        %v395 = vpop.f32.mrb[0].mxu0
        %v396 = vadd.f32 0.0, %v395
        %v397 = vpop.f32.mrb[0].mxu0
        %v398 = vadd.f32 0.0, %v397
        %399 = vmatprep.mubr.f32.mxu0 0.0
        %400 = vmatmul.mubr.f32.gmra.mrb[0].mxu0 %v246
        %v401 = vpop.f32.mrb[0].mxu0
        %v402 = vadd.f32 0.0, %v401
        %v403 = vpop.f32.mrb[0].mxu0
        %v404 = vadd.f32 0.0, %v403
        %405 = vmatprep.mubr.f32.mxu0 0.0
        %406 = vmatmul.mubr.f32.gmra.mrb[0].mxu0 %v249
        %v407 = vpop.f32.mrb[0].mxu0
        %v408 = vadd.f32 0.0, %v407
        %v409 = vpop.f32.mrb[0].mxu0
        %v410 = vadd.f32 0.0, %v409
        %411 = vdwg.mxu0
        %412 = vst [vmem:[%s167] sm:$0xff] %v318
        %413 = vst [vmem:[%s167 + $0x8] sm:$0xff] %v320
        %414 = vst [vmem:[%s167 + $0x10] sm:$0xff] %v324
        %415 = vst [vmem:[%s167 + $0x18] sm:$0xff] %v326
        %416 = vst [vmem:[%s167 + $0x20] sm:$0xff] %v330
        %417 = vst [vmem:[%s167 + $0x28] sm:$0xff] %v332
        %418 = vst [vmem:[%s167 + $0x30] sm:$0xff] %v336
        %419 = vst [vmem:[%s167 + $0x38] sm:$0xff] %v338
        %420 = vst [vmem:[%s167 + $0x40] sm:$0xff] %v342
        %421 = vst [vmem:[%s167 + $0x48] sm:$0xff] %v344
        %422 = vst [vmem:[%s167 + $0x50] sm:$0xff] %v348
        %423 = vst [vmem:[%s167 + $0x58] sm:$0xff] %v350
        %424 = vst [vmem:[%s167 + $0x60] sm:$0xff] %v354
        %425 = vst [vmem:[%s167 + $0x68] sm:$0xff] %v356
        %426 = vst [vmem:[%s167 + $0x70] sm:$0xff] %v360
        %427 = vst [vmem:[%s167 + $0x78] sm:$0xff] %v362
        %428 = vst [vmem:[%s167 + $0x80] sm:$0xff] %v366
        %429 = vst [vmem:[%s167 + $0x88] sm:$0xff] %v368
        %430 = vst [vmem:[%s167 + $0x90] sm:$0xff] %v372
        %431 = vst [vmem:[%s167 + $0x98] sm:$0xff] %v374
        %432 = vst [vmem:[%s167 + $0xa0] sm:$0xff] %v378
        %433 = vst [vmem:[%s167 + $0xa8] sm:$0xff] %v380
        %434 = vst [vmem:[%s167 + $0xb0] sm:$0xff] %v384
        %435 = vst [vmem:[%s167 + $0xb8] sm:$0xff] %v386
        %436 = vst [vmem:[%s167 + $0xc0] sm:$0xff] %v390
        %437 = vst [vmem:[%s167 + $0xc8] sm:$0xff] %v392
        %438 = vst [vmem:[%s167 + $0xd0] sm:$0xff] %v396
        %439 = vst [vmem:[%s167 + $0xd8] sm:$0xff] %v398
        %440 = vst [vmem:[%s167 + $0xe0] sm:$0xff] %v402
        %441 = vst [vmem:[%s167 + $0xe8] sm:$0xff] %v404
        %442 = vst [vmem:[%s167 + $0xf0] sm:$0xff] %v408
        %443 = vst [vmem:[%s167 + $0xf8] sm:$0xff] %v410
        %s444 = sand.u32 %s90, 1
        %s445 = scalar_lea.sflag [#allocation3], %s444
        %s446 = sand.u32 %s90, 1
        %s447 = smul.addr %s446, 256
        %s448 = scalar_lea.vmem [#allocation2], %s447
        // Predicated region
        $region29: #{tpu_custom_call.1} parent=27 // pred_check
          %p449 = pneg %p100
        $region30: #{tpu_custom_call.1} parent=27 // pred_check_branch
          %451 = sbr.rel (%p449) target = $region32
        $region31: #{tpu_custom_call.1} parent=27 // pred_region
          %s452 = smul.u32 16, %s20
          %s453 = smul.u32 2, %s21
          %s455 = ssub.s32 4096, 4096
          %456 = vsyncadd %s445, %s455
          %s457 = smul.addr %s452, 2
          %s458 = sadd.s32 %s453, %s457
          %s459 = smul.addr %s458, 128
          %s460 = scalar_lea.hbm %s2, %s459
          %s461 = sshll.u32 %s448, 4
          %s462 = int_to_ptr.vmem [resolvable:$true] %s461
          %467 = dma.vmem_to_hbm [thread:$0]  %s462, 4096, %s460, %s445, 256, 256, 16
        $region32: #{tpu_custom_call.1} parent=27 // pred_fallthru
          _
      $region28: #{tpu_custom_call.1} parent=5 // pred_fallthru
        _
      %p468 = scmp.le.s32.totalorder 2, %s11
      // Predicated region
      $region33: #{tpu_custom_call.1} parent=5 // pred_check
        %p469 = pneg %p468
      $region34: #{tpu_custom_call.1} parent=5 // pred_check_branch
        %471 = sbr.rel (%p469) target = $region36
      $region35: #{tpu_custom_call.1} parent=5 // pred_region
        %s472 = ssub.s32 %s11, 2
        // Predicated region
        $region37: #{tpu_custom_call.1} parent=35 // pred_check
          %p473 = pneg %p106
        $region38: #{tpu_custom_call.1} parent=35 // pred_check_branch
          %475 = sbr.rel (%p473) target = $region40
        $region39: #{tpu_custom_call.1} parent=35 // pred_region
          %s476 = sand.u32 %s91, 1
          %s477 = scalar_lea.sflag [#allocation3], %s476
          %s478 = sand.u32 %s91, 1
          %s479 = smul.addr %s478, 256
          %s480 = scalar_lea.vmem [#allocation2], %s479
          %481 = dma.done %s477, 4096
        $region40: #{tpu_custom_call.1} parent=35 // pred_fallthru
          _
      $region36: #{tpu_custom_call.1} parent=5 // pred_fallthru
        _
    $region6: #{tpu_custom_call.1} parent=1 // loop_footer
      %s15 = sadd.s32 1, %s11
    $region7: #{tpu_custom_call.1} parent=1 // loop_footer_branch
      %10 = sbr.rel target = $region3
    $region8: #{tpu_custom_call.1} parent=1 // loop_exit
      _
    %482 = vsyncpa [#allocation3], 1
    %s483 = scalar_lea.sflag [#allocation3], 1
    %484 = vsyncpa %s483, 1

</llo_original>
